<compile_context>
chip_gen: v5e
topology: v5e:2x2
jax: 0.10.0
libtpu: 0.0.40
codegen_flags: <defaults>
</compile_context>

<pallas_src>
import math
import jax
import jax.numpy as jnp
from jax import lax
from jax.experimental import pallas as pl
from jax.experimental.pallas import tpu as pltpu


# ---------------------------------------------------------------------------
# Pallas kernel: fused 3-layer critic MLP for one batch tile
# ---------------------------------------------------------------------------
def _critic_mlp_kernel(s_ref, a_ref, w1s_ref, w1a_ref, w2_ref, c_ref, q_ref):
    # c_ref packs the small f32 operands into one (8, n_feat) block:
    #   row 0 = b1, row 1 = b2, row 2 = w3 (as a row), row 3 = b3 (broadcast), rows 4-7 = 0
    b1 = c_ref[0:1, :]
    b2 = c_ref[1:2, :]
    w3 = c_ref[2:3, :]
    b3 = c_ref[3:4, 0:1]

    s = s_ref[...].astype(jnp.bfloat16)
    a = a_ref[...].astype(jnp.bfloat16)

    # Layer 1: fused concat as a split matmul (bf16 MXU inputs, f32 accumulation).
    h1 = (jnp.dot(s, w1s_ref[...], preferred_element_type=jnp.float32)
          + jnp.dot(a, w1a_ref[...], preferred_element_type=jnp.float32)
          + b1)
    h1 = jnp.maximum(h1, 0.0)                                    # ReLU (f32, VPU)

    # Layer 2.
    h2 = jnp.dot(h1.astype(jnp.bfloat16), w2_ref[...],
                 preferred_element_type=jnp.float32) + b2
    h2 = jnp.maximum(h2, 0.0)                                    # ReLU (f32, VPU)

    # Layer 3 (scalar Q head), lane-dense: contract w3 (1, n_feat) with h2 (bt, n_feat)
    # over n_feat -> (1, bt) row.  Same "NT" dimension_numbers as q @ k^T in flash
    # attention; gives the lane-dense output directly (no (bt,1) masked stores).
    q_row = lax.dot_general(w3, h2, (((1,), (1,)), ((), ())),
                            preferred_element_type=jnp.float32) + b3   # (1, bt)
    q_ref[...] = q_row.astype(q_ref.dtype)


# ---------------------------------------------------------------------------
# Tile selection: >=2 grid steps for big batches (v7x megacore), minimal padding.
# ---------------------------------------------------------------------------
def _pick_batch_tile(batch):
    if batch <= 256:
        # Single tile, rounded to a multiple of 128 (lane-dense output, clean bf16 layout).
        return max(128, ((batch + 127) // 128) * 128)
    best_key, best_bt = None, 256
    for bt in (1024, 512, 256):
        tiles = -(-batch // bt)
        if tiles < 2:           # need >= 2 grid steps so both v7x TensorCores get work
            continue
        key = (tiles * bt, -bt)  # minimize padded size; tie-break toward larger tiles
        if best_key is None or key < best_key:
            best_key, best_bt = key, bt
    return best_bt


# ---------------------------------------------------------------------------
# Wrapper
# ---------------------------------------------------------------------------
def critic_forward(state, action, params):
    """Pallas equivalent of CriticNetwork.forward(state, action)."""
    w1s, w1a, w2, consts = params

    # torch `.float()`; bf16 inputs are kept as-is (the MXU path downcasts anyway, so an
    # f32 upcast would only add HBM traffic in the memory-bound regime).
    if state.dtype != jnp.bfloat16:
        state = state.astype(jnp.float32)
    if action.dtype != jnp.bfloat16:
        action = action.astype(jnp.float32)

    batch, state_dim = state.shape
    action_dim = action.shape[1]
    n_feat = w2.shape[0]

    bt = _pick_batch_tile(batch)
    num_tiles = -(-batch // bt)
    padded = num_tiles * bt
    pad = padded - batch
    if pad:
        state = jnp.pad(state, ((0, pad), (0, 0)))
        action = jnp.pad(action, ((0, pad), (0, 0)))

    # Weights/biases use constant block indices -> DMA'd once, resident across grid steps.
    const_spec = lambda shape: pl.BlockSpec(shape, lambda i: (0, 0))

    # VMEM budget from the actual footprint (double-buffered I/O tiles + resident weights
    # + f32/bf16 intermediates).  Floor at 32 MiB, cap at 64 MiB (v7x physical VMEM).
    in_bytes = state.dtype.itemsize
    weight_bytes = (w1s.size + w1a.size + w2.size) * 2 + consts.size * 4
    io_tile_bytes = bt * (state_dim + action_dim) * in_bytes + bt * 4
    act_bytes = bt * n_feat * (4 + 4 + 2 + 2)
    vmem_needed = 2 * weight_bytes + 2 * io_tile_bytes + act_bytes
    vmem_limit = int(min(max(2 * vmem_needed, 32 * 2 ** 20), 64 * 2 ** 20))

    cost = pl.CostEstimate(
        flops=int(2 * padded * ((state_dim + action_dim) * n_feat
                                + n_feat * n_feat + n_feat)),
        transcendentals=0,
        bytes_accessed=int(state.size * state.dtype.itemsize
                           + action.size * action.dtype.itemsize
                           + (w1s.size + w1a.size + w2.size) * 2
                           + consts.size * 4 + padded * 4),
    )

    q = pl.pallas_call(
        _critic_mlp_kernel,
        out_shape=jax.ShapeDtypeStruct((num_tiles, 1, bt), jnp.float32),
        grid=(num_tiles,),
        in_specs=[
            pl.BlockSpec((bt, state_dim), lambda i: (i, 0)),     # state tile
            pl.BlockSpec((bt, action_dim), lambda i: (i, 0)),    # action tile
            const_spec((state_dim, n_feat)),                     # W1_state (bf16)
            const_spec((action_dim, n_feat)),                    # W1_action (bf16)
            const_spec((n_feat, n_feat)),                        # W2 (bf16)
            const_spec((8, n_feat)),                             # packed b1/b2/w3/b3 (f32)
        ],
        # Lane-dense output: one (1, bt) row per tile (leading tile dim squeezed).
        out_specs=pl.BlockSpec((None, 1, bt), lambda i: (i, 0, 0)),
        compiler_params=pltpu.CompilerParams(
            dimension_semantics=("parallel",),                   # shard tiles over v7x TCs
            vmem_limit_bytes=vmem_limit),
        cost_estimate=cost,
    )(state, action, w1s, w1a, w2, consts)

    q = q.reshape(padded)[:batch]
    # torch.squeeze(q) on a (batch, 1) tensor: drops all size-1 dims.
    return jnp.squeeze(q.reshape(batch, 1))


# ---------------------------------------------------------------------------
# Deterministic parameter init (mirrors PyTorch init in __init__)
# ---------------------------------------------------------------------------
def _xavier_uniform(key, fan_in, fan_out, gain, shape):
    bound = gain * math.sqrt(6.0 / (fan_in + fan_out))
    return jax.random.uniform(key, shape, jnp.float32, -bound, bound)


def _linear_bias(key, fan_in, shape):
    bound = 1.0 / math.sqrt(fan_in)
    return jax.random.uniform(key, shape, jnp.float32, -bound, bound)


def init_critic_params(key, state_dim, action_dim, n_features, n_output=1):
    assert n_output == 1, "critic Q head must be scalar for the row-matmul last layer"
    n_input = state_dim + action_dim
    k = jax.random.split(key, 6)
    gain_relu = math.sqrt(2.0)
    gain_linear = 1.0

    # W1 drawn as one (n_input, n_feat) matrix (same distribution as PyTorch's
    # xavier_uniform on the (out, in) weight), split into state/action parts so the
    # concat is fused into the kernel.
    w1 = _xavier_uniform(k[0], n_input, n_features, gain_relu, (n_input, n_features))
    w1s = w1[:state_dim].astype(jnp.bfloat16)
    w1a = w1[state_dim:].astype(jnp.bfloat16)
    b1 = _linear_bias(k[1], n_input, (n_features,))

    w2 = _xavier_uniform(k[2], n_features, n_features, gain_relu,
                         (n_features, n_features)).astype(jnp.bfloat16)
    b2 = _linear_bias(k[3], n_features, (n_features,))

    w3 = _xavier_uniform(k[4], n_features, n_output, gain_linear, (n_features,))
    b3 = _linear_bias(k[5], n_features, ())

    # Pack the four tiny f32 operands into one (8, n_feat) block (1 DMA stream).
    consts = jnp.zeros((8, n_features), jnp.float32)
    consts = consts.at[0].set(b1).at[1].set(b2).at[2].set(w3).at[3].set(b3)
    return (w1s, w1a, w2, consts)


# ---------------------------------------------------------------------------
# References (for sanity checks)
# ---------------------------------------------------------------------------
def _unpack(params):
    w1s, w1a, w2, consts = params
    return w1s, w1a, consts[0], w2, consts[1], consts[2], consts[3, 0]


def critic_forward_ref_bf16(state, action, params):
    # Matches the kernel's layer-1/2 numerics (bf16 matmul inputs, f32 accumulation).
    w1s, w1a, b1, w2, b2, w3, b3 = _unpack(params)
    s = state.astype(jnp.float32).astype(jnp.bfloat16)
    a = action.astype(jnp.float32).astype(jnp.bfloat16)
    h1 = jnp.maximum(jnp.dot(s, w1s, preferred_element_type=jnp.float32)
                     + jnp.dot(a, w1a, preferred_element_type=jnp.float32) + b1, 0.0)
    h2 = jnp.maximum(jnp.dot(h1.astype(jnp.bfloat16), w2,
                             preferred_element_type=jnp.float32) + b2, 0.0)
    q = jnp.sum(h2 * w3, axis=-1) + b3
    return jnp.squeeze(q.reshape(-1, 1))


def critic_forward_ref_f32(state, action, params):
    # Full-precision version of the original module's math (same stored weights).
    w1s, w1a, b1, w2, b2, w3, b3 = _unpack(params)
    x = jnp.concatenate([state.astype(jnp.float32), action.astype(jnp.float32)], axis=1)
    w1 = jnp.concatenate([w1s.astype(jnp.float32), w1a.astype(jnp.float32)], axis=0)
    h1 = jnp.maximum(x @ w1 + b1, 0.0)
    h2 = jnp.maximum(h1 @ w2.astype(jnp.float32) + b2, 0.0)
    q = h2 @ w3 + b3
    return jnp.squeeze(q.reshape(-1, 1))


if __name__ == "__main__":
    key = jax.random.PRNGKey(0)

    # Small shapes consistent with the module: n_input = state_dim + action_dim,
    # n_output = 1 (scalar Q-value).
    batch = 8
    state_dim = 6
    action_dim = 2
    n_features = 32
    n_output = 1

    k_state, k_action, k_params = jax.random.split(key, 3)
    state = jax.random.normal(k_state, (batch, state_dim), jnp.float32)
    action = jax.random.normal(k_action, (batch, action_dim), jnp.float32)
    params = init_critic_params(k_params, state_dim, action_dim, n_features, n_output)

    q = jax.block_until_ready(critic_forward(state, action, params))
    assert q.shape == (batch,), f"unexpected output shape {q.shape}"

    # Tight-ish check vs a reference sharing the kernel's bf16 layer-1/2 numerics
    # (small slack for the f32 head's MXU precision/reduction order).
    q_bf16 = jax.block_until_ready(critic_forward_ref_bf16(state, action, params))
    assert jnp.allclose(q, q_bf16, atol=2e-2, rtol=2e-2), "mismatch vs bf16-matched reference"

    # Loose check vs the full-precision math of the original module.
    q_f32 = jax.block_until_ready(critic_forward_ref_f32(state, action, params))
    assert jnp.allclose(q, q_f32, atol=1e-1, rtol=1e-1), "mismatch vs f32 reference"

    print("KERNEL_OK")
</pallas_src>

<mosaic_0001>
module attributes {stable_mosaic.version = 11 : i64} {
  func.func @_critic_mlp_kernel(%arg0: i32, %arg1: memref<128x6xf32, #tpu.memory_space<vmem>>, %arg2: memref<128x2xf32, #tpu.memory_space<vmem>>, %arg3: memref<6x32xbf16, #tpu.memory_space<vmem>>, %arg4: memref<2x32xbf16, #tpu.memory_space<vmem>>, %arg5: memref<32x32xbf16, #tpu.memory_space<vmem>>, %arg6: memref<8x32xf32, #tpu.memory_space<vmem>>, %arg7: memref<1x1x128xf32, #tpu.memory_space<vmem>>) attributes {dimension_semantics = [#tpu.dimension_semantics<parallel>], iteration_bounds = array<i64: 1>, scalar_prefetch = 0 : i64, scratch_operands = 0 : i64, tpu.core_type = #tpu.core_type<tc>, window_params = [{transform_indices = @transform_0, window_bounds = array<i64: 128, 6>}, {transform_indices = @transform_1, window_bounds = array<i64: 128, 2>}, {pipeline_mode = #tpu.pipeline_mode<synchronous>, transform_indices = @transform_2, window_bounds = array<i64: 6, 32>}, {pipeline_mode = #tpu.pipeline_mode<synchronous>, transform_indices = @transform_3, window_bounds = array<i64: 2, 32>}, {pipeline_mode = #tpu.pipeline_mode<synchronous>, transform_indices = @transform_4, window_bounds = array<i64: 32, 32>}, {pipeline_mode = #tpu.pipeline_mode<synchronous>, transform_indices = @transform_5, window_bounds = array<i64: 8, 32>}, {transform_indices = @transform_6, window_bounds = array<i64: 1, 1, 128>}]} {
    %c0 = arith.constant 0 : index
    %c0_0 = arith.constant 0 : index
    %0 = vector.load %arg6[%c0, %c0_0] : memref<8x32xf32, #tpu.memory_space<vmem>>, vector<1x32xf32>
    %c1 = arith.constant 1 : index
    %c0_1 = arith.constant 0 : index
    %1 = vector.load %arg6[%c1, %c0_1] : memref<8x32xf32, #tpu.memory_space<vmem>>, vector<1x32xf32>
    %c2 = arith.constant 2 : index
    %c0_2 = arith.constant 0 : index
    %2 = vector.load %arg6[%c2, %c0_2] : memref<8x32xf32, #tpu.memory_space<vmem>>, vector<1x32xf32>
    %c3 = arith.constant 3 : index
    %c0_3 = arith.constant 0 : index
    %3 = vector.load %arg6[%c3, %c0_3] : memref<8x32xf32, #tpu.memory_space<vmem>>, vector<1x1xf32>
    %c0_4 = arith.constant 0 : index
    %c0_5 = arith.constant 0 : index
    %4 = vector.load %arg1[%c0_4, %c0_5] : memref<128x6xf32, #tpu.memory_space<vmem>>, vector<128x6xf32>
    %5 = arith.truncf %4 : vector<128x6xf32> to vector<128x6xbf16>
    %c0_6 = arith.constant 0 : index
    %c0_7 = arith.constant 0 : index
    %6 = vector.load %arg2[%c0_6, %c0_7] : memref<128x2xf32, #tpu.memory_space<vmem>>, vector<128x2xf32>
    %7 = arith.truncf %6 : vector<128x2xf32> to vector<128x2xbf16>
    %c0_8 = arith.constant 0 : index
    %c0_9 = arith.constant 0 : index
    %8 = vector.load %arg3[%c0_8, %c0_9] : memref<6x32xbf16, #tpu.memory_space<vmem>>, vector<6x32xbf16>
    %cst = arith.constant dense<0.000000e+00> : vector<128x32xf32>
    %9 = tpu.matmul %5, %8, %cst {dimension_numbers = #tpu.dot_dimension_numbers<[1], [0], [0], [1], [0, 0, 1, 1], [], []>} : vector<128x6xbf16>, vector<6x32xbf16>, vector<128x32xf32> -> vector<128x32xf32>
    %c0_10 = arith.constant 0 : index
    %c0_11 = arith.constant 0 : index
    %10 = vector.load %arg4[%c0_10, %c0_11] : memref<2x32xbf16, #tpu.memory_space<vmem>>, vector<2x32xbf16>
    %cst_12 = arith.constant dense<0.000000e+00> : vector<128x32xf32>
    %11 = tpu.matmul %7, %10, %cst_12 {dimension_numbers = #tpu.dot_dimension_numbers<[1], [0], [0], [1], [0, 0, 1, 1], [], []>} : vector<128x2xbf16>, vector<2x32xbf16>, vector<128x32xf32> -> vector<128x32xf32>
    %12 = arith.addf %9, %11 : vector<128x32xf32>
    %13 = vector.broadcast %0 : vector<1x32xf32> to vector<128x32xf32>
    %14 = arith.addf %12, %13 : vector<128x32xf32>
    %cst_13 = arith.constant 0.000000e+00 : f32
    %15 = vector.broadcast %cst_13 : f32 to vector<128x32xf32>
    %16 = arith.maximumf %14, %15 : vector<128x32xf32>
    %17 = arith.truncf %16 : vector<128x32xf32> to vector<128x32xbf16>
    %c0_14 = arith.constant 0 : index
    %c0_15 = arith.constant 0 : index
    %18 = vector.load %arg5[%c0_14, %c0_15] : memref<32x32xbf16, #tpu.memory_space<vmem>>, vector<32x32xbf16>
    %cst_16 = arith.constant dense<0.000000e+00> : vector<128x32xf32>
    %19 = tpu.matmul %17, %18, %cst_16 {dimension_numbers = #tpu.dot_dimension_numbers<[1], [0], [0], [1], [0, 0, 1, 1], [], []>} : vector<128x32xbf16>, vector<32x32xbf16>, vector<128x32xf32> -> vector<128x32xf32>
    %20 = vector.broadcast %1 : vector<1x32xf32> to vector<128x32xf32>
    %21 = arith.addf %19, %20 : vector<128x32xf32>
    %cst_17 = arith.constant 0.000000e+00 : f32
    %22 = vector.broadcast %cst_17 : f32 to vector<128x32xf32>
    %23 = arith.maximumf %21, %22 : vector<128x32xf32>
    %cst_18 = arith.constant dense<0.000000e+00> : vector<1x128xf32>
    %24 = tpu.matmul %2, %23, %cst_18 {dimension_numbers = #tpu.dot_dimension_numbers<[1], [1], [0], [0], [0, 0, 1, 0], [], []>} : vector<1x32xf32>, vector<128x32xf32>, vector<1x128xf32> -> vector<1x128xf32>
    %25 = vector.broadcast %3 : vector<1x1xf32> to vector<1x128xf32>
    %26 = arith.addf %24, %25 : vector<1x128xf32>
    %c0_19 = arith.constant 0 : index
    %c0_20 = arith.constant 0 : index
    %c0_21 = arith.constant 0 : index
    %27 = vector.load %arg7[%c0_19, %c0_20, %c0_21] : memref<1x1x128xf32, #tpu.memory_space<vmem>>, vector<1x1x128xf32>
    %28 = vector.shape_cast %27 : vector<1x1x128xf32> to vector<1x128xf32>
    %29 = vector.shape_cast %26 : vector<1x128xf32> to vector<1x1x128xf32>
    tpu.vector_store %arg7[%c0_19, %c0_20, %c0_21], %29 {strides = array<i32>} : memref<1x1x128xf32, #tpu.memory_space<vmem>>, vector<1x1x128xf32>,
    return
  }
  func.func @transform_0(%arg0: i32) -> (i32, i32) {
    %c0_i32 = arith.constant 0 : i32
    %c0_i32_0 = arith.constant 0 : i32
    return %arg0, %c0_i32 : i32, i32
  }
  func.func @transform_1(%arg0: i32) -> (i32, i32) {
    %c0_i32 = arith.constant 0 : i32
    %c0_i32_0 = arith.constant 0 : i32
    return %arg0, %c0_i32 : i32, i32
  }
  func.func @transform_2(%arg0: i32) -> (i32, i32) {
    %c0_i32 = arith.constant 0 : i32
    %c0_i32_0 = arith.constant 0 : i32
    %c0_i32_1 = arith.constant 0 : i32
    return %c0_i32, %c0_i32_0 : i32, i32
  }
  func.func @transform_3(%arg0: i32) -> (i32, i32) {
    %c0_i32 = arith.constant 0 : i32
    %c0_i32_0 = arith.constant 0 : i32
    %c0_i32_1 = arith.constant 0 : i32
    return %c0_i32, %c0_i32_0 : i32, i32
  }
  func.func @transform_4(%arg0: i32) -> (i32, i32) {
    %c0_i32 = arith.constant 0 : i32
    %c0_i32_0 = arith.constant 0 : i32
    %c0_i32_1 = arith.constant 0 : i32
    return %c0_i32, %c0_i32_0 : i32, i32
  }
  func.func @transform_5(%arg0: i32) -> (i32, i32) {
    %c0_i32 = arith.constant 0 : i32
    %c0_i32_0 = arith.constant 0 : i32
    %c0_i32_1 = arith.constant 0 : i32
    return %c0_i32, %c0_i32_0 : i32, i32
  }
  func.func @transform_6(%arg0: i32) -> (i32, i32, i32) {
    %c0_i32 = arith.constant 0 : i32
    %c0_i32_0 = arith.constant 0 : i32
    %c0_i32_1 = arith.constant 0 : i32
    return %arg0, %c0_i32, %c0_i32_0 : i32, i32, i32
  }
}

</mosaic_0001>

<llo_original>
// kernel: tpu_custom_call.1
$region0: #{tpu_custom_call.1}
  #allocation0 [shape = 'u32[]', space=smem, size = 0x4, offset = 0x4, fixed_abs, tag = 'smem constant byte address 0x4 - core index']
  #allocation1 [shape = 'u32[72,128]{1,0:T(1,128)}', space=vmem, size = 0x9000, scoped, tag = 'internal scratch']
  %s0 = inlined_call_operand.vmem [shape: f32[128,6], index: 0, kind: input, shape index: {}]
  %s1 = inlined_call_operand.vmem [shape: f32[128,2], index: 1, kind: input, shape index: {}]
  %s2 = inlined_call_operand.vmem [shape: bf16[6,32], index: 2, kind: input, shape index: {}]
  %s3 = inlined_call_operand.vmem [shape: bf16[2,32], index: 3, kind: input, shape index: {}]
  %s4 = inlined_call_operand.vmem [shape: bf16[32,32], index: 4, kind: input, shape index: {}]
  %s5 = inlined_call_operand.vmem [shape: f32[8,32], index: 5, kind: input, shape index: {}]
  %s6 = inlined_call_operand.hbm [shape: f32[1,1,128], index: 6, kind: output, shape index: {}]
  %s7 = sld [smem:[#allocation0]]
  $region34: #{tpu_custom_call.1} parent=0
    _
  %s9 = ssub.s32 1, %s7
  %s10 = scalar_select 0, %s9, %s7
  $region1: #{tpu_custom_call.1} parent=0
    #allocation2 [shape = 'u8[512]{0}', space=vmem, size = 0x400, scoped, tag = 'output window, operand 0, single buffered']
    #allocation3 [shape = 's32[1]{0}', space=sflag, size = 0x4, scoped, tag = 'scoped memory for tpu_custom_call.1']
    %11 = vsyncpa [#allocation3], 0
    // Predicated region
    $region2: #{tpu_custom_call.1} parent=1 // pred_check
      _
    $region3: #{tpu_custom_call.1} parent=1 // pred_check_branch
      %13 = sbr.rel (0) target = $region5
    $region4: #{tpu_custom_call.1} parent=1 // pred_region
      _
    $region5: #{tpu_custom_call.1} parent=1 // pred_fallthru
      _
    // Predicated region
    $region6: #{tpu_custom_call.1} parent=1 // pred_check
      _
    $region7: #{tpu_custom_call.1} parent=1 // pred_check_branch
      %15 = sbr.rel (0) target = $region9
    $region8: #{tpu_custom_call.1} parent=1 // pred_region
      _
    $region9: #{tpu_custom_call.1} parent=1 // pred_fallthru
      _
    // Predicated region
    $region10: #{tpu_custom_call.1} parent=1 // pred_check
      _
    $region11: #{tpu_custom_call.1} parent=1 // pred_check_branch
      %17 = sbr.rel (0) target = $region13
    $region12: #{tpu_custom_call.1} parent=1 // pred_region
      _
    $region13: #{tpu_custom_call.1} parent=1 // pred_fallthru
      _
    // Predicated region
    $region14: #{tpu_custom_call.1} parent=1 // pred_check
      _
    $region15: #{tpu_custom_call.1} parent=1 // pred_check_branch
      %19 = sbr.rel (0) target = $region17
    $region16: #{tpu_custom_call.1} parent=1 // pred_region
      _
    $region17: #{tpu_custom_call.1} parent=1 // pred_fallthru
      _
    // Predicated region
    $region18: #{tpu_custom_call.1} parent=1 // pred_check
      _
    $region19: #{tpu_custom_call.1} parent=1 // pred_check_branch
      %21 = sbr.rel (0) target = $region21
    $region20: #{tpu_custom_call.1} parent=1 // pred_region
      _
    $region21: #{tpu_custom_call.1} parent=1 // pred_fallthru
      _
    // Predicated region
    $region22: #{tpu_custom_call.1} parent=1 // pred_check
      _
    $region23: #{tpu_custom_call.1} parent=1 // pred_check_branch
      %23 = sbr.rel (0) target = $region25
    $region24: #{tpu_custom_call.1} parent=1 // pred_region
      _
    $region25: #{tpu_custom_call.1} parent=1 // pred_fallthru
      _
    %v25 = vld [vmem:[%s5] sm:$0x1]
    %v26 = vld [vmem:[%s5 + $0x1] sm:$0x1]
    %v27 = vld [vmem:[%s5 + $0x2] sm:$0x1]
    %v28 = vld [vmem:[%s5 + $0x3] sm:$0x1]
    %v29 = vld [vmem:[%s0] sm:$0xff]
    %v30 = vld [vmem:[%s0 + $0x8] sm:$0xff]
    %v31 = vld [vmem:[%s0 + $0x10] sm:$0xff]
    %v32 = vld [vmem:[%s0 + $0x18] sm:$0xff]
    %v33 = vld [vmem:[%s0 + $0x20] sm:$0xff]
    %v34 = vld [vmem:[%s0 + $0x28] sm:$0xff]
    %v35 = vld [vmem:[%s0 + $0x30] sm:$0xff]
    %v36 = vld [vmem:[%s0 + $0x38] sm:$0xff]
    %v37 = vld [vmem:[%s0 + $0x40] sm:$0xff]
    %v38 = vld [vmem:[%s0 + $0x48] sm:$0xff]
    %v39 = vld [vmem:[%s0 + $0x50] sm:$0xff]
    %v40 = vld [vmem:[%s0 + $0x58] sm:$0xff]
    %v41 = vld [vmem:[%s0 + $0x60] sm:$0xff]
    %v42 = vld [vmem:[%s0 + $0x68] sm:$0xff]
    %v43 = vld [vmem:[%s0 + $0x70] sm:$0xff]
    %v44 = vld [vmem:[%s0 + $0x78] sm:$0xff]
    %v45 = vpack.c.bf16 %v30, %v29
    %v46 = vpack.c.bf16 %v32, %v31
    %v47 = vpack.c.bf16 %v34, %v33
    %v48 = vpack.c.bf16 %v36, %v35
    %v49 = vpack.c.bf16 %v38, %v37
    %v50 = vpack.c.bf16 %v40, %v39
    %v51 = vpack.c.bf16 %v42, %v41
    %v52 = vpack.c.bf16 %v44, %v43
    %v53 = vld [vmem:[%s1] sm:$0xff]
    %v54 = vld [vmem:[%s1 + $0x8] sm:$0xff]
    %v55 = vld [vmem:[%s1 + $0x10] sm:$0xff]
    %v56 = vld [vmem:[%s1 + $0x18] sm:$0xff]
    %v57 = vld [vmem:[%s1 + $0x20] sm:$0xff]
    %v58 = vld [vmem:[%s1 + $0x28] sm:$0xff]
    %v59 = vld [vmem:[%s1 + $0x30] sm:$0xff]
    %v60 = vld [vmem:[%s1 + $0x38] sm:$0xff]
    %v61 = vld [vmem:[%s1 + $0x40] sm:$0xff]
    %v62 = vld [vmem:[%s1 + $0x48] sm:$0xff]
    %v63 = vld [vmem:[%s1 + $0x50] sm:$0xff]
    %v64 = vld [vmem:[%s1 + $0x58] sm:$0xff]
    %v65 = vld [vmem:[%s1 + $0x60] sm:$0xff]
    %v66 = vld [vmem:[%s1 + $0x68] sm:$0xff]
    %v67 = vld [vmem:[%s1 + $0x70] sm:$0xff]
    %v68 = vld [vmem:[%s1 + $0x78] sm:$0xff]
    %v69 = vpack.c.bf16 %v54, %v53
    %v70 = vpack.c.bf16 %v56, %v55
    %v71 = vpack.c.bf16 %v58, %v57
    %v72 = vpack.c.bf16 %v60, %v59
    %v73 = vpack.c.bf16 %v62, %v61
    %v74 = vpack.c.bf16 %v64, %v63
    %v75 = vpack.c.bf16 %v66, %v65
    %v76 = vpack.c.bf16 %v68, %v67
    %v77 = vld [vmem:[%s2] sm:$0x7]
    %v78 = vld [vmem:[%s3] sm:$0x1]
    %vm79 = vcmask 15360
    %v81 = vsel %vm79, %v69, 0
    %v84 = vsel %vm79, %v70, 0
    %v87 = vsel %vm79, %v71, 0
    %v90 = vsel %vm79, %v72, 0
    %v93 = vsel %vm79, %v73, 0
    %v96 = vsel %vm79, %v74, 0
    %v99 = vsel %vm79, %v75, 0
    %v102 = vsel %vm79, %v76, 0
    %vm104 = vcmask 1040384
    %v106 = vsel %vm104, %v78, 0
    %108 = vmatpush.bf16.msra.mxu0 0
    %109 = vmatpush.bf16.msra.mxu0 0
    %110 = vmatpush.bf16.msra.mxu0 0
    %111 = vmatpush.bf16.msra.mxu0 0
    %112 = vmatpush.bf16.msra.mxu0 0
    %113 = vmatpush.bf16.msra.mxu0 0
    %114 = vmatpush.bf16.msra.mxu0 0
    %115 = vmatpush.bf16.msra.mxu0 %v106
    %116 = vmatmul.bf16.gmra.mxu0 %v81
    %v117 = vpop.f32.mrf.mxu0
    %v118 = vadd.f32 0.0, %v117
    %v119 = vpop.f32.mrf.mxu0
    %v120 = vadd.f32 0.0, %v119
    %121 = vmatmul.bf16.gmra.mxu0 %v84
    %v122 = vpop.f32.mrf.mxu0
    %v123 = vadd.f32 0.0, %v122
    %v124 = vpop.f32.mrf.mxu0
    %v125 = vadd.f32 0.0, %v124
    %126 = vmatmul.bf16.gmra.mxu0 %v87
    %v127 = vpop.f32.mrf.mxu0
    %v128 = vadd.f32 0.0, %v127
    %v129 = vpop.f32.mrf.mxu0
    %v130 = vadd.f32 0.0, %v129
    %131 = vmatmul.bf16.gmra.mxu0 %v90
    %v132 = vpop.f32.mrf.mxu0
    %v133 = vadd.f32 0.0, %v132
    %v134 = vpop.f32.mrf.mxu0
    %v135 = vadd.f32 0.0, %v134
    %136 = vmatmul.bf16.gmra.mxu0 %v93
    %v137 = vpop.f32.mrf.mxu0
    %v138 = vadd.f32 0.0, %v137
    %v139 = vpop.f32.mrf.mxu0
    %v140 = vadd.f32 0.0, %v139
    %141 = vmatmul.bf16.gmra.mxu0 %v96
    %v142 = vpop.f32.mrf.mxu0
    %v143 = vadd.f32 0.0, %v142
    %v144 = vpop.f32.mrf.mxu0
    %v145 = vadd.f32 0.0, %v144
    %146 = vmatmul.bf16.gmra.mxu0 %v99
    %v147 = vpop.f32.mrf.mxu0
    %v148 = vadd.f32 0.0, %v147
    %v149 = vpop.f32.mrf.mxu0
    %v150 = vadd.f32 0.0, %v149
    %151 = vmatmul.bf16.gmra.mxu0 %v102
    %v152 = vpop.f32.mrf.mxu0
    %v153 = vadd.f32 0.0, %v152
    %v154 = vpop.f32.mrf.mxu0
    %v155 = vadd.f32 0.0, %v154
    %156 = vdwg.mxu0
    %vm157 = vcmask 48128
    %v159 = vsel %vm157, %v45, 0
    %v162 = vsel %vm157, %v46, 0
    %v165 = vsel %vm157, %v47, 0
    %v168 = vsel %vm157, %v48, 0
    %v171 = vsel %vm157, %v49, 0
    %v174 = vsel %vm157, %v50, 0
    %v177 = vsel %vm157, %v51, 0
    %v180 = vsel %vm157, %v52, 0
    %vm182 = vcmask 1042432
    %v184 = vsel %vm182, %v77, 0
    %186 = vmatpush.bf16.msra.mxu0 0
    %187 = vmatpush.bf16.msra.mxu0 0
    %188 = vmatpush.bf16.msra.mxu0 0
    %189 = vmatpush.bf16.msra.mxu0 0
    %190 = vmatpush.bf16.msra.mxu0 0
    %191 = vmatpush.bf16.msra.mxu0 0
    %192 = vmatpush.bf16.msra.mxu0 0
    %193 = vmatpush.bf16.msra.mxu0 %v184
    %194 = vmatmul.bf16.gmra.mxu0 %v159
    %v195 = vpop.f32.mrf.mxu0
    %v196 = vadd.f32 %v118, %v195
    %v197 = vpop.f32.mrf.mxu0
    %v198 = vadd.f32 %v120, %v197
    %199 = vmatmul.bf16.gmra.mxu0 %v162
    %v200 = vpop.f32.mrf.mxu0
    %v201 = vadd.f32 %v123, %v200
    %v202 = vpop.f32.mrf.mxu0
    %v203 = vadd.f32 %v125, %v202
    %204 = vmatmul.bf16.gmra.mxu0 %v165
    %v205 = vpop.f32.mrf.mxu0
    %v206 = vadd.f32 %v128, %v205
    %v207 = vpop.f32.mrf.mxu0
    %v208 = vadd.f32 %v130, %v207
    %209 = vmatmul.bf16.gmra.mxu0 %v168
    %v210 = vpop.f32.mrf.mxu0
    %v211 = vadd.f32 %v133, %v210
    %v212 = vpop.f32.mrf.mxu0
    %v213 = vadd.f32 %v135, %v212
    %214 = vmatmul.bf16.gmra.mxu0 %v171
    %v215 = vpop.f32.mrf.mxu0
    %v216 = vadd.f32 %v138, %v215
    %v217 = vpop.f32.mrf.mxu0
    %v218 = vadd.f32 %v140, %v217
    %219 = vmatmul.bf16.gmra.mxu0 %v174
    %v220 = vpop.f32.mrf.mxu0
    %v221 = vadd.f32 %v143, %v220
    %v222 = vpop.f32.mrf.mxu0
    %v223 = vadd.f32 %v145, %v222
    %224 = vmatmul.bf16.gmra.mxu0 %v177
    %v225 = vpop.f32.mrf.mxu0
    %v226 = vadd.f32 %v148, %v225
    %v227 = vpop.f32.mrf.mxu0
    %v228 = vadd.f32 %v150, %v227
    %229 = vmatmul.bf16.gmra.mxu0 %v180
    %v230 = vpop.f32.mrf.mxu0
    %v231 = vadd.f32 %v153, %v230
    %v232 = vpop.f32.mrf.mxu0
    %v233 = vadd.f32 %v155, %v232
    %234 = vdwg.mxu0
    %v235 = vperm.slane %v25, 0
    %v236 = vadd.f32 %v196, %v235
    %v237 = vadd.f32 %v198, %v235
    %v238 = vadd.f32 %v201, %v235
    %v239 = vadd.f32 %v203, %v235
    %v240 = vadd.f32 %v206, %v235
    %v241 = vadd.f32 %v208, %v235
    %v242 = vadd.f32 %v211, %v235
    %v243 = vadd.f32 %v213, %v235
    %v244 = vadd.f32 %v216, %v235
    %v245 = vadd.f32 %v218, %v235
    %v246 = vadd.f32 %v221, %v235
    %v247 = vadd.f32 %v223, %v235
    %v248 = vadd.f32 %v226, %v235
    %v249 = vadd.f32 %v228, %v235
    %v250 = vadd.f32 %v231, %v235
    %v251 = vadd.f32 %v233, %v235
    %v252 = vmax.f32 %v236, 0.0
    %v253 = vmax.f32 %v237, 0.0
    %v254 = vmax.f32 %v238, 0.0
    %v255 = vmax.f32 %v239, 0.0
    %v256 = vmax.f32 %v240, 0.0
    %v257 = vmax.f32 %v241, 0.0
    %v258 = vmax.f32 %v242, 0.0
    %v259 = vmax.f32 %v243, 0.0
    %v260 = vmax.f32 %v244, 0.0
    %v261 = vmax.f32 %v245, 0.0
    %v262 = vmax.f32 %v246, 0.0
    %v263 = vmax.f32 %v247, 0.0
    %v264 = vmax.f32 %v248, 0.0
    %v265 = vmax.f32 %v249, 0.0
    %v266 = vmax.f32 %v250, 0.0
    %v267 = vmax.f32 %v251, 0.0
    %v268 = vpack.c.bf16 %v253, %v252
    %v269 = vpack.c.bf16 %v255, %v254
    %v270 = vpack.c.bf16 %v257, %v256
    %v271 = vpack.c.bf16 %v259, %v258
    %v272 = vpack.c.bf16 %v261, %v260
    %v273 = vpack.c.bf16 %v263, %v262
    %v274 = vpack.c.bf16 %v265, %v264
    %v275 = vpack.c.bf16 %v267, %v266
    %v276 = vld [vmem:[%s4] sm:$0xf]
    %v277 = vld [vmem:[%s4 + $0x4] sm:$0xf]
    %v278 = vld [vmem:[%s4 + $0x8] sm:$0xf]
    %v279 = vld [vmem:[%s4 + $0xc] sm:$0xf]
    %v280 = vperm.slane %v26, 0
    %v285 = vunpack.c.l.b16 %v276
    %v286 = vunpack.c.l.b16 %v277
    %v287 = vunpack.c.l.b16 %v278
    %v288 = vunpack.c.l.b16 %v279
    %v289 = vpack.c.b16 %v286, %v285
    %v290 = vpack.c.b16 %v288, %v287
    %vm293 = vcmask 261120
    %v295 = vsel %vm293, %v268, 0
    %v298 = vsel %vm293, %v269, 0
    %v301 = vsel %vm293, %v270, 0
    %v304 = vsel %vm293, %v271, 0
    %v307 = vsel %vm293, %v272, 0
    %v310 = vsel %vm293, %v273, 0
    %v313 = vsel %vm293, %v274, 0
    %v316 = vsel %vm293, %v275, 0
    %318 = vmatpush.bf16.msra.mxu0 0
    %319 = vmatpush.bf16.msra.mxu0 0
    %320 = vmatpush.bf16.msra.mxu0 0
    %321 = vmatpush.bf16.msra.mxu0 0
    %322 = vmatpush.bf16.msra.mxu0 0
    %323 = vmatpush.bf16.msra.mxu0 0
    %324 = vmatpush.bf16.msra.mxu0 %v290
    %325 = vmatpush.bf16.msra.mxu0 %v289
    %326 = vmatmul.bf16.gmra.mxu0 %v295
    %v327 = vpop.f32.mrf.mxu0
    %v328 = vadd.f32 %v280, %v327
    %v329 = vpop.f32.mrf.mxu0
    %v330 = vadd.f32 %v280, %v329
    %331 = vmatmul.bf16.gmra.mxu0 %v298
    %v332 = vpop.f32.mrf.mxu0
    %v333 = vadd.f32 %v280, %v332
    %v334 = vpop.f32.mrf.mxu0
    %v335 = vadd.f32 %v280, %v334
    %336 = vmatmul.bf16.gmra.mxu0 %v301
    %v337 = vpop.f32.mrf.mxu0
    %v338 = vadd.f32 %v280, %v337
    %v339 = vpop.f32.mrf.mxu0
    %v340 = vadd.f32 %v280, %v339
    %341 = vmatmul.bf16.gmra.mxu0 %v304
    %v342 = vpop.f32.mrf.mxu0
    %v343 = vadd.f32 %v280, %v342
    %v344 = vpop.f32.mrf.mxu0
    %v345 = vadd.f32 %v280, %v344
    %346 = vmatmul.bf16.gmra.mxu0 %v307
    %v347 = vpop.f32.mrf.mxu0
    %v348 = vadd.f32 %v280, %v347
    %v349 = vpop.f32.mrf.mxu0
    %v350 = vadd.f32 %v280, %v349
    %351 = vmatmul.bf16.gmra.mxu0 %v310
    %v352 = vpop.f32.mrf.mxu0
    %v353 = vadd.f32 %v280, %v352
    %v354 = vpop.f32.mrf.mxu0
    %v355 = vadd.f32 %v280, %v354
    %356 = vmatmul.bf16.gmra.mxu0 %v313
    %v357 = vpop.f32.mrf.mxu0
    %v358 = vadd.f32 %v280, %v357
    %v359 = vpop.f32.mrf.mxu0
    %v360 = vadd.f32 %v280, %v359
    %361 = vmatmul.bf16.gmra.mxu0 %v316
    %v362 = vpop.f32.mrf.mxu0
    %v363 = vadd.f32 %v280, %v362
    %v364 = vpop.f32.mrf.mxu0
    %v365 = vadd.f32 %v280, %v364
    %366 = vdwg.mxu0
    %v367 = vmax.f32 %v328, 0.0
    %v368 = vmax.f32 %v330, 0.0
    %v369 = vmax.f32 %v333, 0.0
    %v370 = vmax.f32 %v335, 0.0
    %v371 = vmax.f32 %v338, 0.0
    %v372 = vmax.f32 %v340, 0.0
    %v373 = vmax.f32 %v343, 0.0
    %v374 = vmax.f32 %v345, 0.0
    %v375 = vmax.f32 %v348, 0.0
    %v376 = vmax.f32 %v350, 0.0
    %v377 = vmax.f32 %v353, 0.0
    %v378 = vmax.f32 %v355, 0.0
    %v379 = vmax.f32 %v358, 0.0
    %v380 = vmax.f32 %v360, 0.0
    %v381 = vmax.f32 %v363, 0.0
    %v382 = vmax.f32 %v365, 0.0
    %384 = vset.pattern.permute.xlu0 0
    %385 = vperm.xlu0 %384, %v28
    %v386 = vpop.permute.xlu0 %385
    %v389 = vsel %vm293, %v27, 0
    %v392 = vsel %vm293, %v367, 0
    %v395 = vsel %vm293, %v368, 0
    %v398 = vsel %vm293, %v369, 0
    %v401 = vsel %vm293, %v370, 0
    %v404 = vsel %vm293, %v371, 0
    %v407 = vsel %vm293, %v372, 0
    %v410 = vsel %vm293, %v373, 0
    %v413 = vsel %vm293, %v374, 0
    %v416 = vsel %vm293, %v375, 0
    %v419 = vsel %vm293, %v376, 0
    %v422 = vsel %vm293, %v377, 0
    %v425 = vsel %vm293, %v378, 0
    %v428 = vsel %vm293, %v379, 0
    %v431 = vsel %vm293, %v380, 0
    %v434 = vsel %vm293, %v381, 0
    %v437 = vsel %vm293, %v382, 0
    %439 = vmatpush.xpose.msra.mxu0 %v437
    %440 = vmatpush.xpose.msra.mxu0 %v434
    %441 = vmatpush.xpose.msra.mxu0 %v431
    %442 = vmatpush.xpose.msra.mxu0 %v428
    %443 = vmatpush.xpose.msra.mxu0 %v425
    %444 = vmatpush.xpose.msra.mxu0 %v422
    %445 = vmatpush.xpose.msra.mxu0 %v419
    %446 = vmatpush.xpose.msra.mxu0 %v416
    %447 = vmatpush.xpose.msra.mxu0 %v413
    %448 = vmatpush.xpose.msra.mxu0 %v410
    %449 = vmatpush.xpose.msra.mxu0 %v407
    %450 = vmatpush.xpose.msra.mxu0 %v404
    %451 = vmatpush.xpose.msra.mxu0 %v401
    %452 = vmatpush.xpose.msra.mxu0 %v398
    %453 = vmatpush.xpose.msra.mxu0 %v395
    %454 = vmatpush.xpose.msra.mxu0 %v392
    %455 = vmatmul.f32.gmra.mxu0 %v389
    %v456 = vpop.f32.mrf.mxu0
    %v457 = vadd.f32 %v386, %v456
    %458 = vdwg.mxu0
    %459 = vst [vmem:[#allocation2] sm:$0x1] %v457
    // Predicated region
    $region26: #{tpu_custom_call.1} parent=1 // pred_check
      _
    $region27: #{tpu_custom_call.1} parent=1 // pred_check_branch
      %461 = sbr.rel (0) target = $region29
    $region28: #{tpu_custom_call.1} parent=1 // pred_region
      %463 = vsyncadd [#allocation3], 0
      %s465 = sshll.u32 [#allocation2], 4
      %s466 = int_to_ptr.vmem [resolvable:$true] %s465
      %s467 = sshll.u32 %s6, 4
      %s468 = int_to_ptr.hbm [resolvable:$true] %s467
      %470 = dma.vmem_to_hbm [thread:$0]  %s466, 16, %s468, [#allocation3]
    $region29: #{tpu_custom_call.1} parent=1 // pred_fallthru
      _
    // Predicated region
    $region30: #{tpu_custom_call.1} parent=1 // pred_check
      _
    $region31: #{tpu_custom_call.1} parent=1 // pred_check_branch
      %472 = sbr.rel (0) target = $region33
    $region32: #{tpu_custom_call.1} parent=1 // pred_region
      %474 = dma.done [#allocation3], 16
    $region33: #{tpu_custom_call.1} parent=1 // pred_fallthru
      _
    %475 = vsyncpa [#allocation3], 1

</llo_original>
